<compile_context>
chip_gen: v6e
topology: v6e:2x2x1
jax: 0.10.0
libtpu: 0.0.40
codegen_flags: <defaults>
</compile_context>

<pallas_src>
import functools

import numpy as np
import jax
import jax.numpy as jnp
from jax.experimental import pallas as pl
from jax.experimental.pallas import tpu as pltpu


# ----------------------------- Pallas kernel ------------------------------ #

def _softplus(x):
    # numerically stable softplus; -logsigmoid(x) == softplus(-x)
    return jnp.maximum(x, 0.0) + jnp.log1p(jnp.exp(-jnp.abs(x)))


def _word2qdm_loss_kernel(x_ref, out_ref, *, batch, tb):
    i = pl.program_id(0)

    @pl.when(i == 0)
    def _():
        out_ref[...] = jnp.zeros_like(out_ref)

    at = x_ref[0]                                      # (TB, F) target  [Re|Im]
    ac = x_ref[1]                                      # (TB, F) context [Re|Im]
    an = x_ref[2]                                      # (TB, F) negative[Re|Im]

    # Hermitian density matrices: Re(tr(A B)) = sum(ReA*ReB + ImA*ImB)
    tc = jnp.sum(at * ac, axis=1, keepdims=True)       # (TB, 1)
    ng = jnp.sum(at * an, axis=1, keepdims=True)       # (TB, 1)

    # loss_i = -logsigmoid(tc) - logsigmoid(-ng) = softplus(-tc) + softplus(ng)
    per_ex = _softplus(-tc) + _softplus(ng)            # (TB, 1)

    # mask batch-padding rows
    row = i * tb + jax.lax.broadcasted_iota(jnp.int32, per_ex.shape, 0)
    per_ex = jnp.where(row < batch, per_ex, 0.0)

    out_ref[...] += jnp.sum(per_ex) * (1.0 / batch)    # running mean over B


def word2qdm_loss(a_target, a_context, a_neg):
    """a_*: (B, D, D) complex density matrices -> scalar float32 loss."""
    B, D, _ = a_target.shape
    f32 = jnp.float32
    F = 2 * D * D
    F_pad = max(128, ((F + 127) // 128) * 128)          # lane-dense reduce axis

    def pack(a):
        re = jnp.real(a).reshape(B, D * D).astype(f32)
        im = jnp.imag(a).reshape(B, D * D).astype(f32)
        x = jnp.concatenate([re, im], axis=-1)          # (B, F)
        if F_pad != F:
            x = jnp.pad(x, ((0, 0), (0, F_pad - F)))    # zero pad: traces unchanged
        return x

    x = jnp.stack([pack(a_target), pack(a_context), pack(a_neg)])   # (3, B, F_pad)

    # Batch tile: as large as possible while 3 planes, double-buffered, f32
    # stay under ~24 MiB (safe for v7x's 32 MiB scoped VMEM default).
    tb_cap = max(8, ((24 << 20) // (3 * 2 * F_pad * 4)) // 8 * 8)
    TB = min(tb_cap, ((B + 7) // 8) * 8)
    B_pad = ((B + TB - 1) // TB) * TB
    if B_pad != B:
        x = jnp.pad(x, ((0, 0), (0, B_pad - B), (0, 0)))

    out = pl.pallas_call(
        functools.partial(_word2qdm_loss_kernel, batch=B, tb=TB),
        out_shape=jax.ShapeDtypeStruct((1, 1), jnp.float32),
        grid=(B_pad // TB,),
        in_specs=[pl.BlockSpec((3, TB, F_pad), lambda i: (0, i, 0))],
        out_specs=pl.BlockSpec((1, 1), lambda i: (0, 0)),
        compiler_params=pltpu.CompilerParams(
            dimension_semantics=("arbitrary",)),
    )(x)
    return out[0, 0]


# --------------------- quantum circuit simulation (glue) ------------------ #
# TODO(synk): PennyLane QNode / BasicEntanglerLayers has no Pallas equivalent;
# the circuit is simulated with explicit statevector gate applications in JAX.

def _apply_rx(state, theta, wire):
    c = jnp.cos(theta / 2).astype(jnp.complex64)
    s = (-1j * jnp.sin(theta / 2)).astype(jnp.complex64)
    gate = jnp.stack([jnp.stack([c, s]), jnp.stack([s, c])])     # (2, 2)
    st = jnp.tensordot(gate, state, axes=[[1], [wire]])
    return jnp.moveaxis(st, 0, wire)


_CNOT = np.array([[1, 0, 0, 0],
                  [0, 1, 0, 0],
                  [0, 0, 0, 1],
                  [0, 0, 1, 0]], dtype=np.complex64).reshape(2, 2, 2, 2)


def _apply_cnot(state, control, target):
    g = jnp.asarray(_CNOT)
    st = jnp.tensordot(g, state, axes=[[2, 3], [control, target]])
    return jnp.moveaxis(st, [0, 1], [control, target])


class Word2QDM:
    def __init__(self, vocab_size, layers, num_qubits, num_dm_qubits, key):
        self.vocab_size = vocab_size
        self.layers = layers
        self.num_qubits = num_qubits
        self.num_dm_qubits = num_dm_qubits
        self.dm_shape = (num_dm_qubits ** 2, num_dm_qubits ** 2)
        k1, k2 = jax.random.split(key)
        std = np.pi
        self.target_params = std * jax.random.normal(
            k1, (vocab_size, layers, num_qubits), dtype=jnp.float32)
        self.context_params = std * jax.random.normal(
            k2, (vocab_size, layers, num_qubits), dtype=jnp.float32)

    def circuit(self, weights):
        """BasicEntanglerLayers(weights) on |0...0>, then reduced density
        matrix over wires [0, num_dm_qubits)."""
        n = self.num_qubits
        state = jnp.zeros((2,) * n, dtype=jnp.complex64)
        state = state.at[(0,) * n].set(1.0 + 0.0j)
        for l in range(self.layers):
            for w in range(n):
                state = _apply_rx(state, weights[l, w], w)
            if n == 2:
                state = _apply_cnot(state, 0, 1)
            elif n > 2:
                for w in range(n):
                    state = _apply_cnot(state, w, (w + 1) % n)
        k = self.num_dm_qubits
        psi = state.reshape(2 ** k, 2 ** (n - k))
        rho = psi @ jnp.conj(psi).T                 # (2^k, 2^k) complex
        return rho.reshape(self.dm_shape)           # matches reference dm_shape quirk

    def forward(self, target_indices, context_indices, neg_indices):
        dm = jax.vmap(self.circuit)
        a_target = dm(self.target_params[target_indices])
        a_context = dm(self.context_params[context_indices])
        # reference uses only neg_indices[i][0]
        a_neg = dm(self.context_params[neg_indices[:, 0]])
        return word2qdm_loss(a_target, a_context, a_neg)


# ---------------------------------- main ----------------------------------- #

if __name__ == "__main__":
    key = jax.random.PRNGKey(0)
    k_model, k_t, k_c, k_n = jax.random.split(key, 4)

    vocab_size, layers, num_qubits, num_dm_qubits = 6, 2, 4, 2
    batch = 8

    model = Word2QDM(vocab_size, layers, num_qubits, num_dm_qubits, k_model)

    target_indices = jax.random.randint(k_t, (batch,), 0, vocab_size)
    context_indices = jax.random.randint(k_c, (batch,), 0, vocab_size)
    neg_indices = jax.random.randint(k_n, (batch, 2), 0, vocab_size)

    loss = model.forward(target_indices, context_indices, neg_indices)
    jax.block_until_ready(loss)
    assert loss.shape == () and jnp.isfinite(loss)
    print("KERNEL_OK")
</pallas_src>

<mosaic_0001>
module attributes {stable_mosaic.version = 11 : i64} {
  func.func @_word2qdm_loss_kernel(%arg0: i32, %arg1: memref<3x8x128xf32, #tpu.memory_space<vmem>>, %arg2: memref<1x1xf32, #tpu.memory_space<vmem>>) attributes {dimension_semantics = [#tpu.dimension_semantics<arbitrary>], iteration_bounds = array<i64: 1>, scalar_prefetch = 0 : i64, scratch_operands = 0 : i64, tpu.core_type = #tpu.core_type<tc>, window_params = [{transform_indices = @transform_0, window_bounds = array<i64: 3, 8, 128>}, {pipeline_mode = #tpu.pipeline_mode<synchronous>, transform_indices = @transform_1, window_bounds = array<i64: 1, 1>}]} {
    %c0_i32 = arith.constant 0 : i32
    %0 = arith.cmpi eq, %arg0, %c0_i32 : i32
    %1 = arith.extui %0 : i1 to i32
    %c0_i32_0 = arith.constant 0 : i32
    %2 = arith.cmpi ne, %1, %c0_i32_0 : i32
    scf.if %2 {
      %cst_21 = arith.constant 0.000000e+00 : f32
      %51 = vector.broadcast %cst_21 : f32 to vector<1x1xf32>
      %c0_22 = arith.constant 0 : index
      %c0_23 = arith.constant 0 : index
      %52 = vector.load %arg2[%c0_22, %c0_23] : memref<1x1xf32, #tpu.memory_space<vmem>>, vector<1x1xf32>
      tpu.vector_store %arg2[%c0_22, %c0_23], %51 {strides = array<i32>} : memref<1x1xf32, #tpu.memory_space<vmem>>, vector<1x1xf32>,
    } else {
    }
    %c0 = arith.constant 0 : index
    %c0_1 = arith.constant 0 : index
    %c0_2 = arith.constant 0 : index
    %3 = vector.load %arg1[%c0, %c0_1, %c0_2] : memref<3x8x128xf32, #tpu.memory_space<vmem>>, vector<1x8x128xf32>
    %4 = vector.shape_cast %3 : vector<1x8x128xf32> to vector<8x128xf32>
    %c1 = arith.constant 1 : index
    %c0_3 = arith.constant 0 : index
    %c0_4 = arith.constant 0 : index
    %5 = vector.load %arg1[%c1, %c0_3, %c0_4] : memref<3x8x128xf32, #tpu.memory_space<vmem>>, vector<1x8x128xf32>
    %6 = vector.shape_cast %5 : vector<1x8x128xf32> to vector<8x128xf32>
    %c2 = arith.constant 2 : index
    %c0_5 = arith.constant 0 : index
    %c0_6 = arith.constant 0 : index
    %7 = vector.load %arg1[%c2, %c0_5, %c0_6] : memref<3x8x128xf32, #tpu.memory_space<vmem>>, vector<1x8x128xf32>
    %8 = vector.shape_cast %7 : vector<1x8x128xf32> to vector<8x128xf32>
    %9 = arith.mulf %4, %6 : vector<8x128xf32>
    %cst = arith.constant dense<0.000000e+00> : vector<8xf32>
    %10 = vector.multi_reduction <add>, %9, %cst [1] : vector<8x128xf32> to vector<8xf32>
    %11 = vector.shape_cast %10 : vector<8xf32> to vector<8x1xf32>
    %12 = arith.mulf %4, %8 : vector<8x128xf32>
    %cst_7 = arith.constant dense<0.000000e+00> : vector<8xf32>
    %13 = vector.multi_reduction <add>, %12, %cst_7 [1] : vector<8x128xf32> to vector<8xf32>
    %14 = vector.shape_cast %13 : vector<8xf32> to vector<8x1xf32>
    %cst_8 = arith.constant 0.000000e+00 : f32
    %15 = vector.broadcast %cst_8 : f32 to vector<8x1xf32>
    %16 = arith.subf %15, %11 : vector<8x1xf32>
    %cst_9 = arith.constant 0.000000e+00 : f32
    %17 = vector.broadcast %cst_9 : f32 to vector<8x1xf32>
    %18 = arith.maximumf %16, %17 : vector<8x1xf32>
    %19 = math.absf %16 : vector<8x1xf32>
    %cst_10 = arith.constant 0.000000e+00 : f32
    %20 = vector.broadcast %cst_10 : f32 to vector<8x1xf32>
    %21 = arith.subf %20, %19 : vector<8x1xf32>
    %22 = math.exp %21 : vector<8x1xf32>
    %23 = math.log1p %22 : vector<8x1xf32>
    %24 = arith.addf %18, %23 : vector<8x1xf32>
    %cst_11 = arith.constant 0.000000e+00 : f32
    %25 = vector.broadcast %cst_11 : f32 to vector<8x1xf32>
    %26 = arith.maximumf %14, %25 : vector<8x1xf32>
    %27 = math.absf %14 : vector<8x1xf32>
    %cst_12 = arith.constant 0.000000e+00 : f32
    %28 = vector.broadcast %cst_12 : f32 to vector<8x1xf32>
    %29 = arith.subf %28, %27 : vector<8x1xf32>
    %30 = math.exp %29 : vector<8x1xf32>
    %31 = math.log1p %30 : vector<8x1xf32>
    %32 = arith.addf %26, %31 : vector<8x1xf32>
    %33 = arith.addf %24, %32 : vector<8x1xf32>
    %c8_i32 = arith.constant 8 : i32
    %34 = arith.muli %arg0, %c8_i32 : i32
    %35 = tpu.iota {dimensions = array<i32: 0>} : vector<8x1xi32>
    %36 = vector.broadcast %34 : i32 to vector<8x1xi32>
    %37 = arith.addi %36, %35 : vector<8x1xi32>
    %c8_i32_13 = arith.constant 8 : i32
    %38 = vector.broadcast %c8_i32_13 : i32 to vector<8x1xi32>
    %39 = arith.cmpi slt, %37, %38 : vector<8x1xi32>
    %cst_14 = arith.constant 0.000000e+00 : f32
    %40 = vector.broadcast %cst_14 : f32 to vector<8x1xf32>
    %41 = arith.select %39, %33, %40 : vector<8x1xi1>, vector<8x1xf32>
    %c0_15 = arith.constant 0 : index
    %c0_16 = arith.constant 0 : index
    %42 = vector.load %arg2[%c0_15, %c0_16] : memref<1x1xf32, #tpu.memory_space<vmem>>, vector<1x1xf32>
    %43 = vector.shape_cast %41 : vector<8x1xf32> to vector<1x8x1xf32>
    %cst_17 = arith.constant dense<0.000000e+00> : vector<1xf32>
    %44 = vector.multi_reduction <add>, %43, %cst_17 [1, 2] : vector<1x8x1xf32> to vector<1xf32>
    %45 = vector.shape_cast %44 : vector<1xf32> to vector<1x1x1xf32>
    %46 = vector.extract %45[0, 0, 0] : f32 from vector<1x1x1xf32>
    %cst_18 = arith.constant 1.250000e-01 : f32
    %47 = arith.mulf %46, %cst_18 : f32
    %48 = vector.broadcast %47 : f32 to vector<1x1xf32>
    %49 = arith.addf %42, %48 : vector<1x1xf32>
    %c0_19 = arith.constant 0 : index
    %c0_20 = arith.constant 0 : index
    %50 = vector.load %arg2[%c0_19, %c0_20] : memref<1x1xf32, #tpu.memory_space<vmem>>, vector<1x1xf32>
    tpu.vector_store %arg2[%c0_19, %c0_20], %49 {strides = array<i32>} : memref<1x1xf32, #tpu.memory_space<vmem>>, vector<1x1xf32>,
    return
  }
  func.func @transform_0(%arg0: i32) -> (i32, i32, i32) {
    %c0_i32 = arith.constant 0 : i32
    %c0_i32_0 = arith.constant 0 : i32
    %c0_i32_1 = arith.constant 0 : i32
    return %c0_i32, %arg0, %c0_i32_0 : i32, i32, i32
  }
  func.func @transform_1(%arg0: i32) -> (i32, i32) {
    %c0_i32 = arith.constant 0 : i32
    %c0_i32_0 = arith.constant 0 : i32
    %c0_i32_1 = arith.constant 0 : i32
    return %c0_i32, %c0_i32_0 : i32, i32
  }
}

</mosaic_0001>

<llo_original>
// kernel: tpu_custom_call.1
$region0: #{tpu_custom_call.1}
  #allocation0 [shape = 'u32[]', space=smem, size = 0x4, offset = 0x4, fixed_abs, tag = 'smem constant byte address 0x4 - core index']
  #allocation1 [shape = 'u32[144,128]{1,0:T(1,128)}', space=vmem, size = 0x12000, scoped, tag = 'internal scratch']
  %s0 = inlined_call_operand.hbm [shape: f32[3,8,128], index: 0, kind: input, shape index: {}]
  %s1 = inlined_call_operand.hbm [shape: f32[1,1], index: 1, kind: output, shape index: {}]
  %s2 = sld [smem:[#allocation0]]
  $region22: #{tpu_custom_call.1} parent=0
    _
  %s4 = ssub.s32 1, %s2
  %s5 = scalar_select 0, %s4, %s2
  $region1: #{tpu_custom_call.1} parent=0
    #allocation2 [shape = 'u8[12288]{0}', space=vmem, size = 0x3000, scoped, tag = 'input window, operand 0, single buffered']
    #allocation3 [shape = 's32[1]{0}', space=sflag, size = 0x4, scoped, tag = 'scoped memory for tpu_custom_call.1']
    #allocation4 [shape = 's32[1]{0}', space=sflag, size = 0x4, scoped, tag = 'scoped memory for tpu_custom_call.1']
    #allocation5 [shape = 'u8[512]{0}', space=vmem, size = 0x400, scoped, tag = 'output window, operand 0, single buffered']
    %6 = vsyncpa [#allocation3], 0
    %7 = vsyncpa [#allocation4], 0
    // Predicated region
    $region2: #{tpu_custom_call.1} parent=1 // pred_check
      _
    $region3: #{tpu_custom_call.1} parent=1 // pred_check_branch
      %9 = sbr.rel (0) target = $region5
    $region4: #{tpu_custom_call.1} parent=1 // pred_region
      %s11 = ssub.s32 384, 384
      %12 = vsyncadd [#allocation3], %s11
      %s13 = sshll.u32 [#allocation2], 4
      %s14 = int_to_ptr.vmem [resolvable:$true] %s13
      %19 = dma.hbm_to_vmem [thread:$0]  %s0, 384, %s14, [#allocation3], 128, 128, 8
    $region5: #{tpu_custom_call.1} parent=1 // pred_fallthru
      _
    // Predicated region
    $region6: #{tpu_custom_call.1} parent=1 // pred_check
      _
    $region7: #{tpu_custom_call.1} parent=1 // pred_check_branch
      %21 = sbr.rel (0) target = $region9
    $region8: #{tpu_custom_call.1} parent=1 // pred_region
      %22 = dma.done [#allocation3], 384
    $region9: #{tpu_custom_call.1} parent=1 // pred_fallthru
      _
    %p23 = scmp.eq.s32.totalorder 0, 0
    // Predicated region
    $region10: #{tpu_custom_call.1} parent=1 // pred_check
      %p24 = pneg %p23
    $region11: #{tpu_custom_call.1} parent=1 // pred_check_branch
      %26 = sbr.rel (%p24) target = $region13
    $region12: #{tpu_custom_call.1} parent=1 // pred_region
      %vm27 = vcmask 0
      %28 = vst.msk [vmem:[#allocation5] sm:$0x1] %vm27, 0.0
    $region13: #{tpu_custom_call.1} parent=1 // pred_fallthru
      _
    %v29 = vld [vmem:[#allocation2] sm:$0xff]
    %s30 = scalar_lea.vmem [#allocation2], 8
    %v31 = vld [vmem:[%s30] sm:$0xff]
    %s32 = scalar_lea.vmem [#allocation2], 16
    %v33 = vld [vmem:[%s32] sm:$0xff]
    %v34 = vmul.f32 %v29, %v31
    %35 = vadd.xlane.f32.xlu0 %v34
    %v36 = vpop.xlane.xlu0 %35
    %v37 = vmul.f32 %v29, %v33
    %38 = vadd.xlane.f32.xlu0 %v37
    %v39 = vpop.xlane.xlu0 %38
    %v40 = vsub.f32 0.0, %v36
    %v41 = vmax.f32 %v40, 0.0
    %v42 = vand.u32 2147483647, %v40
    %v43 = vsub.f32 0.0, %v42
    %v44 = vmul.f32 %v43, 1.442695
    %v45 = vpow.pop %v44
    %v46 = vadd.f32 %v45, 1.0
    %v47 = vlog2.pop %v46
    %v48 = vmul.f32 %v47, 0.6931472
    %v49 = vmul.f32 -0.5, %v45
    %v50 = vadd.f32 %v49, 1.0
    %v51 = vmul.f32 %v50, %v45
    %v52 = vand.u32 2147483647, %v45
    %vm53 = vcmp.lt.f32.partialorder %v52, 0.0004427343
    %v54 = vsel %vm53, %v51, %v48
    %v55 = vadd.f32 %v41, %v54
    %v56 = vmax.f32 %v39, 0.0
    %v57 = vand.u32 2147483647, %v39
    %v58 = vsub.f32 0.0, %v57
    %v59 = vmul.f32 %v58, 1.442695
    %v60 = vpow.pop %v59
    %v61 = vadd.f32 %v60, 1.0
    %v62 = vlog2.pop %v61
    %v63 = vmul.f32 %v62, 0.6931472
    %v64 = vmul.f32 -0.5, %v60
    %v65 = vadd.f32 %v64, 1.0
    %v66 = vmul.f32 %v65, %v60
    %v67 = vand.u32 2147483647, %v60
    %vm68 = vcmp.lt.f32.partialorder %v67, 0.0004427343
    %v69 = vsel %vm68, %v66, %v63
    %v70 = vadd.f32 %v56, %v69
    %v71 = vadd.f32 %v55, %v70
    %s72 = smul.u32 0, 8
    %v73 = vlaneseq
    %v74 = vshrl.u32 %v73, 7
    %v75 = vstv %s72
    %v76 = vadd.s32 %v75, %v74
    %vm77 = vcmp.lt.s32.totalorder %v76, 8
    %v78 = vsel %vm77, %v71, 0.0
    %v79 = vld [vmem:[#allocation5] sm:$0x1]
    %vm80 = vcmask 7168
    %v81 = vsel %vm80, %v78, 0.0
    %82 = vadd.xlane.f32.xlu0 %v81
    %v83 = vpop.xlane.xlu0 %82
    %v84 = vrot.slane %v83, 4
    %v85 = vadd.f32 %v83, %v84
    %v86 = vrot.slane %v85, 2
    %v87 = vadd.f32 %v85, %v86
    %v88 = vrot.slane %v87, 1
    %v89 = vadd.f32 %v87, %v88
    %s90 = vtos %v89
    %s91 = smul.f32 %s90, 0.125
    %v92 = vstv %s91
    %v93 = vadd.f32 %v79, %v92
    %vm94 = vcmask 0
    %95 = vst.msk [vmem:[#allocation5] sm:$0x1] %vm94, %v93
    // Predicated region
    $region14: #{tpu_custom_call.1} parent=1 // pred_check
      _
    $region15: #{tpu_custom_call.1} parent=1 // pred_check_branch
      %97 = sbr.rel (0) target = $region17
    $region16: #{tpu_custom_call.1} parent=1 // pred_region
      %s99 = ssub.s32 16, 16
      %100 = vsyncadd [#allocation4], %s99
      %s102 = sshll.u32 [#allocation5], 4
      %s103 = int_to_ptr.vmem [resolvable:$true] %s102
      %105 = dma.vmem_to_hbm [thread:$0]  %s103, 16, %s1, [#allocation4]
    $region17: #{tpu_custom_call.1} parent=1 // pred_fallthru
      _
    // Predicated region
    $region18: #{tpu_custom_call.1} parent=1 // pred_check
      _
    $region19: #{tpu_custom_call.1} parent=1 // pred_check_branch
      %107 = sbr.rel (0) target = $region21
    $region20: #{tpu_custom_call.1} parent=1 // pred_region
      %108 = dma.done [#allocation4], 16
    $region21: #{tpu_custom_call.1} parent=1 // pred_fallthru
      _
    %109 = vsyncpa [#allocation3], 1
    %110 = vsyncpa [#allocation4], 1

</llo_original>
